<compile_context>
chip_gen: v6e
topology: v6e:2x2x1
jax: 0.10.0
libtpu: 0.0.40
codegen_flags: <defaults>
</compile_context>

<pallas_src>
import jax
import jax.numpy as jnp
from jax.experimental import pallas as pl
from jax.experimental.pallas import tpu as pltpu


_NEG_BIG = -1e9  # bias for padded logit columns: never wins max, exp() underflows to 0


def _round_up(n, m):
    return ((n + m - 1) // m) * m


def _vmem_limit_bytes():
    """Generation-aware scoped-VMEM request: physical capacity minus headroom."""
    cap = 64 << 20  # conservative fallback (v7x per-TensorCore VMEM)
    try:
        cap = int(getattr(pltpu.get_tpu_info(), "vmem_capacity_bytes", cap))
    except Exception:
        pass
    # ~8 MiB headroom on 64 MiB parts, ~16 MiB on 128 MiB parts.
    return max(cap - max(8 << 20, cap // 8), 16 << 20)


def _resident_weight_spec(shape):
    """Constant-index weight block; single-buffered when the jax version allows it."""
    idx_map = lambda i: (0, 0)
    try:
        return pl.BlockSpec(shape, idx_map, pipeline_mode=pl.Buffered(1))
    except (AttributeError, TypeError):
        return pl.BlockSpec(shape, idx_map)


def _choose_batch_tiling(batch, row_io_bytes, row_tmp_bytes, resident_bytes, vmem_limit):
    """Pick (TB, Bp, n_steps): TB as large as the VMEM budget allows (<=2048),
    but with >=2 grid steps once batch >= 16 so both v7x cores get work."""
    b8 = _round_up(batch, 8)
    budget = max(vmem_limit - resident_bytes, 4 << 20)
    cap = (budget // 2) // max(2 * row_io_bytes + row_tmp_bytes, 1)
    cap = max(8, min(2048, (cap // 8) * 8))
    if b8 >= 16:
        cap = min(cap, _round_up(pl.cdiv(b8, 2), 8))
    n_steps = pl.cdiv(b8, cap)
    tb = _round_up(pl.cdiv(b8, n_steps), 8)
    return tb, n_steps * tb, n_steps


def group_model_kernel(x_ref, w1t_ref, b1_ref, w23_ref, b3_ref,
                       idx_ref, out_ref, ent_ref):
    x = x_ref[...].astype(jnp.bfloat16)                                  # (TB, Hp)

    # logits = fwd_func(x): bf16 MXU operands, f32 accumulation
    logits = jnp.dot(x, w1t_ref[...],
                     preferred_element_type=jnp.float32) + b1_ref[...]   # (TB, Gp) f32

    gp = logits.shape[-1]
    max_val = jnp.max(logits, axis=-1, keepdims=True)                    # (TB, 1)

    # first-max-index (matches torch.max tie-break) and its one-hot selector
    col_ids = jax.lax.broadcasted_iota(jnp.int32, logits.shape, 1)       # (TB, Gp)
    masked_ids = jnp.where(logits == max_val, col_ids, gp)
    first_idx = jnp.min(masked_ids, axis=-1, keepdims=True)              # (TB, 1) i32
    one_hot = (col_ids == first_idx).astype(jnp.float32)                 # (TB, Gp)

    # entropic loss, folded:  sum(p*log p) = sum(e*s)/sum(e) - log(sum(e))
    shifted = logits - max_val
    exps = jnp.exp(shifted)
    sum_exp = jnp.sum(exps, axis=-1, keepdims=True)
    ent = (jnp.sum(exps * shifted, axis=-1, keepdims=True) / sum_exp
           - jnp.log(sum_exp))                                           # (TB, 1)

    # output = relu(one_hot @ (w2.T @ w3.T) + b3)  -- W23 fused offline, f32 exact
    z = jnp.dot(one_hot, w23_ref[...],
                preferred_element_type=jnp.float32) + b3_ref[...]        # (TB, Hp)

    idx_ref[...] = first_idx
    out_ref[...] = jnp.maximum(z, 0.0).astype(out_ref.dtype)
    ent_ref[...] = ent


def prepare_group_model_params(w1, b1, w2, w3, b3):
    """Offline parameter prep.

    torch layouts: w1 (G,H)=fwd_func.weight, b1 (G,), w2 (H,G)=fwd_func_2.weight
    (no bias), w3 (H,H)=fwd_func_3.weight, b3 (H,).

    Fuses W23 = w2.T @ w3.T in f32 (valid: no bias/nonlinearity between
    fwd_func_2 and fwd_func_3), pads G/H to 128-lane multiples, casts only the
    x-side weight (w1.T) to bf16. Returns ((w1t, b1p, w23, b3p), (H, G)).
    """
    G, H = w1.shape
    Hp, Gp = _round_up(H, 128), _round_up(G, 128)

    w1t = (jnp.zeros((Hp, Gp), jnp.float32).at[:H, :G].set(w1.T)
           .astype(jnp.bfloat16))
    b1p = jnp.full((1, Gp), _NEG_BIG, jnp.float32).at[0, :G].set(b1)
    w23_small = jnp.dot(w2.T, w3.T, preferred_element_type=jnp.float32,
                        precision=jax.lax.Precision.HIGHEST)
    w23 = jnp.zeros((Gp, Hp), jnp.float32).at[:G, :H].set(w23_small)
    b3p = jnp.zeros((1, Hp), jnp.float32).at[0, :H].set(b3)
    return (w1t, b1p, w23, b3p), (H, G)


def group_model_forward(x, kernel_params, dims, out_dtype=jnp.float32):
    """x: (B, H) float32 or bfloat16 (pass bf16 if upstream allows: halves the
    dominant HBM read). Returns (one_hot (B,G) f32, output (B,H), entropic_loss (B,))."""
    w1t, b1p, w23, b3p = kernel_params
    H, G = dims
    Hp, Gp = w1t.shape
    B = x.shape[0]

    vmem_limit = _vmem_limit_bytes()
    x_item = 2 if (Hp != H or x.dtype == jnp.bfloat16) else jnp.dtype(x.dtype).itemsize
    out_item = jnp.dtype(out_dtype).itemsize

    # Resident (single-buffered) weights + per-row pipelined I/O + rough temporaries.
    resident = Hp * Gp * 2 + Gp * Hp * 4 + 2 * 4 * (Gp + Hp)
    row_io = Hp * x_item + Hp * out_item + 8
    row_tmp = 16 * Gp + 4 * Hp + 16
    TB, Bp, n_steps = _choose_batch_tiling(B, row_io, row_tmp, resident, vmem_limit)

    if x.shape == (Bp, Hp):
        xp = x                                   # zero-copy: kernel reads x directly
    else:
        # unavoidable pad copy -> fold the bf16 cast into it (halves kernel x read)
        xp = jnp.zeros((Bp, Hp), jnp.bfloat16).at[:B, :H].set(x.astype(jnp.bfloat16))

    flops = 4 * Bp * Hp * Gp                     # two matmuls w/ f32 accumulation
    transcendentals = Bp * (Gp + 2)              # exp per element + log + div per row
    bytes_accessed = (Bp * Hp * jnp.dtype(xp.dtype).itemsize
                      + Hp * Gp * 2 + Gp * Hp * 4 + 4 * (Gp + Hp)
                      + Bp * Hp * out_item + Bp * 8)

    def run(single_buffer_weights):
        if single_buffer_weights:
            w1t_spec = _resident_weight_spec((Hp, Gp))
            w23_spec = _resident_weight_spec((Gp, Hp))
        else:
            w1t_spec = pl.BlockSpec((Hp, Gp), lambda i: (0, 0))
            w23_spec = pl.BlockSpec((Gp, Hp), lambda i: (0, 0))
        return pl.pallas_call(
            group_model_kernel,
            out_shape=(
                jax.ShapeDtypeStruct((Bp, 1), jnp.int32),     # argmax index per row
                jax.ShapeDtypeStruct((Bp, Hp), out_dtype),    # relu(one_hot @ W23 + b3)
                jax.ShapeDtypeStruct((Bp, 1), jnp.float32),   # entropic loss per row
            ),
            grid=(n_steps,),
            in_specs=[
                pl.BlockSpec((TB, Hp), lambda i: (i, 0)),     # x tile (pipelined)
                w1t_spec,                                     # w1t (VMEM-resident)
                pl.BlockSpec((1, Gp), lambda i: (0, 0)),      # b1
                w23_spec,                                     # W23 (VMEM-resident, f32)
                pl.BlockSpec((1, Hp), lambda i: (0, 0)),      # b3
            ],
            out_specs=(
                pl.BlockSpec((TB, 1), lambda i: (i, 0)),
                pl.BlockSpec((TB, Hp), lambda i: (i, 0)),
                pl.BlockSpec((TB, 1), lambda i: (i, 0)),
            ),
            compiler_params=pltpu.CompilerParams(
                dimension_semantics=("parallel",),
                vmem_limit_bytes=int(vmem_limit),
            ),
            cost_estimate=pl.CostEstimate(
                flops=int(flops),
                transcendentals=int(transcendentals),
                bytes_accessed=int(bytes_accessed),
            ),
        )(xp, w1t, b1p, w23, b3p)

    try:
        idx, out, ent = run(True)
    except Exception:
        # Fallback for jax versions where single-buffered pipeline_mode is rejected
        # at lowering time (only reachable in eager execution; harmless under jit).
        idx, out, ent = run(False)

    one_hot = jax.nn.one_hot(idx[:B, 0], G, dtype=jnp.float32)
    if Bp != B or Hp != H:
        out = out[:B, :H]
    return one_hot, out, ent[:B, 0]


if __name__ == "__main__":
    B, hidden_dim, num_group = 8, 32, 16

    key = jax.random.PRNGKey(0)
    kx, k1, k2, k3, k4, k5 = jax.random.split(key, 6)
    x = jax.random.normal(kx, (B, hidden_dim), jnp.float32)
    # torch-layout parameters (fwd_func weight std=0.02 as in the module)
    w1 = 0.02 * jax.random.normal(k1, (num_group, hidden_dim), jnp.float32)
    b1 = 0.01 * jax.random.normal(k2, (num_group,), jnp.float32)
    w2 = 0.05 * jax.random.normal(k3, (hidden_dim, num_group), jnp.float32)
    w3 = 0.05 * jax.random.normal(k4, (hidden_dim, hidden_dim), jnp.float32)
    b3 = 0.01 * jax.random.normal(k5, (hidden_dim,), jnp.float32)

    kernel_params, dims = prepare_group_model_params(w1, b1, w2, w3, b3)
    one_hot, output, entropic_loss = group_model_forward(x, kernel_params, dims)
    jax.block_until_ready((one_hot, output, entropic_loss))

    # pure-JAX eval-mode reference (same bf16 logits rounding as the kernel;
    # exact f32 row-selection for the output path)
    logits_ref = jnp.dot(x.astype(jnp.bfloat16), w1.T.astype(jnp.bfloat16),
                         preferred_element_type=jnp.float32) + b1
    max_idx_ref = jnp.argmax(logits_ref, -1)
    ref_onehot = jax.nn.one_hot(max_idx_ref, num_group, dtype=jnp.float32)
    w23_ref = jnp.dot(w2.T, w3.T, preferred_element_type=jnp.float32,
                      precision=jax.lax.Precision.HIGHEST)
    ref_out = jax.nn.relu(w23_ref[max_idx_ref] + b3)
    ref_ent = jnp.sum(jax.nn.softmax(logits_ref, -1)
                      * jax.nn.log_softmax(logits_ref, -1), -1)

    assert one_hot.shape == (B, num_group)
    assert output.shape == (B, hidden_dim)
    assert entropic_loss.shape == (B,)
    assert jnp.allclose(one_hot, ref_onehot), "one_hot mismatch"
    assert jnp.allclose(output, ref_out, atol=1e-4), "output mismatch"
    assert jnp.allclose(entropic_loss, ref_ent, atol=1e-3), "entropic_loss mismatch"

    print("KERNEL_OK")
</pallas_src>

<mosaic_0001>
module attributes {stable_mosaic.version = 11 : i64} {
  func.func @group_model_kernel(%arg0: i32, %arg1: memref<8x128xbf16, #tpu.memory_space<vmem>>, %arg2: memref<128x128xbf16, #tpu.memory_space<vmem>>, %arg3: memref<1x128xf32, #tpu.memory_space<vmem>>, %arg4: memref<128x128xf32, #tpu.memory_space<vmem>>, %arg5: memref<1x128xf32, #tpu.memory_space<vmem>>, %arg6: memref<8x1xi32, #tpu.memory_space<vmem>>, %arg7: memref<8x128xf32, #tpu.memory_space<vmem>>, %arg8: memref<8x1xf32, #tpu.memory_space<vmem>>) attributes {dimension_semantics = [#tpu.dimension_semantics<parallel>], iteration_bounds = array<i64: 1>, scalar_prefetch = 0 : i64, scratch_operands = 0 : i64, tpu.core_type = #tpu.core_type<tc>, window_params = [{transform_indices = @transform_0, window_bounds = array<i64: 8, 128>}, {pipeline_mode = #tpu.pipeline_mode<synchronous>, transform_indices = @transform_1, window_bounds = array<i64: 128, 128>}, {pipeline_mode = #tpu.pipeline_mode<synchronous>, transform_indices = @transform_2, window_bounds = array<i64: 1, 128>}, {pipeline_mode = #tpu.pipeline_mode<synchronous>, transform_indices = @transform_3, window_bounds = array<i64: 128, 128>}, {pipeline_mode = #tpu.pipeline_mode<synchronous>, transform_indices = @transform_4, window_bounds = array<i64: 1, 128>}, {transform_indices = @transform_5, window_bounds = array<i64: 8, 1>}, {transform_indices = @transform_6, window_bounds = array<i64: 8, 128>}, {transform_indices = @transform_7, window_bounds = array<i64: 8, 1>}]} {
    %c0 = arith.constant 0 : index
    %c0_0 = arith.constant 0 : index
    %0 = vector.load %arg1[%c0, %c0_0] : memref<8x128xbf16, #tpu.memory_space<vmem>>, vector<8x128xbf16>
    %c0_1 = arith.constant 0 : index
    %c0_2 = arith.constant 0 : index
    %1 = vector.load %arg2[%c0_1, %c0_2] : memref<128x128xbf16, #tpu.memory_space<vmem>>, vector<128x128xbf16>
    %cst = arith.constant dense<0.000000e+00> : vector<8x128xf32>
    %2 = tpu.matmul %0, %1, %cst {dimension_numbers = #tpu.dot_dimension_numbers<[1], [0], [0], [1], [0, 0, 1, 1], [], []>} : vector<8x128xbf16>, vector<128x128xbf16>, vector<8x128xf32> -> vector<8x128xf32>
    %c0_3 = arith.constant 0 : index
    %c0_4 = arith.constant 0 : index
    %3 = vector.load %arg3[%c0_3, %c0_4] : memref<1x128xf32, #tpu.memory_space<vmem>>, vector<1x128xf32>
    %4 = vector.broadcast %3 : vector<1x128xf32> to vector<8x128xf32>
    %5 = arith.addf %2, %4 : vector<8x128xf32>
    %cst_5 = arith.constant dense<0xFF800000> : vector<8xf32>
    %6 = vector.multi_reduction <maximumf>, %5, %cst_5 [1] : vector<8x128xf32> to vector<8xf32>
    %7 = vector.shape_cast %6 : vector<8xf32> to vector<8x1xf32>
    %8 = tpu.iota {dimensions = array<i32: 1>} : vector<8x128xi32>
    %9 = vector.broadcast %7 : vector<8x1xf32> to vector<8x128xf32>
    %10 = arith.cmpf oeq, %5, %9 : vector<8x128xf32>
    %c128_i32 = arith.constant 128 : i32
    %11 = vector.broadcast %c128_i32 : i32 to vector<8x128xi32>
    %12 = arith.select %10, %8, %11 : vector<8x128xi1>, vector<8x128xi32>
    %cst_6 = arith.constant dense<2147483647> : vector<8xi32>
    %13 = vector.multi_reduction <minsi>, %12, %cst_6 [1] : vector<8x128xi32> to vector<8xi32>
    %14 = vector.shape_cast %13 : vector<8xi32> to vector<8x1xi32>
    %15 = vector.broadcast %14 : vector<8x1xi32> to vector<8x128xi32>
    %16 = arith.cmpi eq, %8, %15 : vector<8x128xi32>
    %17 = arith.extui %16 : vector<8x128xi1> to vector<8x128xi32>
    %18 = arith.sitofp %17 : vector<8x128xi32> to vector<8x128xf32>
    %19 = vector.broadcast %7 : vector<8x1xf32> to vector<8x128xf32>
    %20 = arith.subf %5, %19 : vector<8x128xf32>
    %21 = math.exp %20 : vector<8x128xf32>
    %cst_7 = arith.constant dense<0.000000e+00> : vector<8xf32>
    %22 = vector.multi_reduction <add>, %21, %cst_7 [1] : vector<8x128xf32> to vector<8xf32>
    %23 = vector.shape_cast %22 : vector<8xf32> to vector<8x1xf32>
    %24 = arith.mulf %21, %20 : vector<8x128xf32>
    %cst_8 = arith.constant dense<0.000000e+00> : vector<8xf32>
    %25 = vector.multi_reduction <add>, %24, %cst_8 [1] : vector<8x128xf32> to vector<8xf32>
    %26 = vector.shape_cast %25 : vector<8xf32> to vector<8x1xf32>
    %27 = arith.divf %26, %23 : vector<8x1xf32>
    %28 = math.log %23 : vector<8x1xf32>
    %29 = arith.subf %27, %28 : vector<8x1xf32>
    %c0_9 = arith.constant 0 : index
    %c0_10 = arith.constant 0 : index
    %30 = vector.load %arg4[%c0_9, %c0_10] : memref<128x128xf32, #tpu.memory_space<vmem>>, vector<128x128xf32>
    %cst_11 = arith.constant dense<0.000000e+00> : vector<8x128xf32>
    %31 = tpu.matmul %18, %30, %cst_11 {dimension_numbers = #tpu.dot_dimension_numbers<[1], [0], [0], [1], [0, 0, 1, 1], [], []>} : vector<8x128xf32>, vector<128x128xf32>, vector<8x128xf32> -> vector<8x128xf32>
    %c0_12 = arith.constant 0 : index
    %c0_13 = arith.constant 0 : index
    %32 = vector.load %arg5[%c0_12, %c0_13] : memref<1x128xf32, #tpu.memory_space<vmem>>, vector<1x128xf32>
    %33 = vector.broadcast %32 : vector<1x128xf32> to vector<8x128xf32>
    %34 = arith.addf %31, %33 : vector<8x128xf32>
    %c0_14 = arith.constant 0 : index
    %c0_15 = arith.constant 0 : index
    %35 = vector.load %arg6[%c0_14, %c0_15] : memref<8x1xi32, #tpu.memory_space<vmem>>, vector<8x1xi32>
    tpu.vector_store %arg6[%c0_14, %c0_15], %14 {strides = array<i32>} : memref<8x1xi32, #tpu.memory_space<vmem>>, vector<8x1xi32>,
    %cst_16 = arith.constant 0.000000e+00 : f32
    %36 = vector.broadcast %cst_16 : f32 to vector<8x128xf32>
    %37 = arith.maximumf %34, %36 : vector<8x128xf32>
    %c0_17 = arith.constant 0 : index
    %c0_18 = arith.constant 0 : index
    %38 = vector.load %arg7[%c0_17, %c0_18] : memref<8x128xf32, #tpu.memory_space<vmem>>, vector<8x128xf32>
    tpu.vector_store %arg7[%c0_17, %c0_18], %37 {strides = array<i32>} : memref<8x128xf32, #tpu.memory_space<vmem>>, vector<8x128xf32>,
    %c0_19 = arith.constant 0 : index
    %c0_20 = arith.constant 0 : index
    %39 = vector.load %arg8[%c0_19, %c0_20] : memref<8x1xf32, #tpu.memory_space<vmem>>, vector<8x1xf32>
    tpu.vector_store %arg8[%c0_19, %c0_20], %29 {strides = array<i32>} : memref<8x1xf32, #tpu.memory_space<vmem>>, vector<8x1xf32>,
    return
  }
  func.func @transform_0(%arg0: i32) -> (i32, i32) {
    %c0_i32 = arith.constant 0 : i32
    %c0_i32_0 = arith.constant 0 : i32
    return %arg0, %c0_i32 : i32, i32
  }
  func.func @transform_1(%arg0: i32) -> (i32, i32) {
    %c0_i32 = arith.constant 0 : i32
    %c0_i32_0 = arith.constant 0 : i32
    %c0_i32_1 = arith.constant 0 : i32
    return %c0_i32, %c0_i32_0 : i32, i32
  }
  func.func @transform_2(%arg0: i32) -> (i32, i32) {
    %c0_i32 = arith.constant 0 : i32
    %c0_i32_0 = arith.constant 0 : i32
    %c0_i32_1 = arith.constant 0 : i32
    return %c0_i32, %c0_i32_0 : i32, i32
  }
  func.func @transform_3(%arg0: i32) -> (i32, i32) {
    %c0_i32 = arith.constant 0 : i32
    %c0_i32_0 = arith.constant 0 : i32
    %c0_i32_1 = arith.constant 0 : i32
    return %c0_i32, %c0_i32_0 : i32, i32
  }
  func.func @transform_4(%arg0: i32) -> (i32, i32) {
    %c0_i32 = arith.constant 0 : i32
    %c0_i32_0 = arith.constant 0 : i32
    %c0_i32_1 = arith.constant 0 : i32
    return %c0_i32, %c0_i32_0 : i32, i32
  }
  func.func @transform_5(%arg0: i32) -> (i32, i32) {
    %c0_i32 = arith.constant 0 : i32
    %c0_i32_0 = arith.constant 0 : i32
    return %arg0, %c0_i32 : i32, i32
  }
  func.func @transform_6(%arg0: i32) -> (i32, i32) {
    %c0_i32 = arith.constant 0 : i32
    %c0_i32_0 = arith.constant 0 : i32
    return %arg0, %c0_i32 : i32, i32
  }
  func.func @transform_7(%arg0: i32) -> (i32, i32) {
    %c0_i32 = arith.constant 0 : i32
    %c0_i32_0 = arith.constant 0 : i32
    return %arg0, %c0_i32 : i32, i32
  }
}

module attributes {stable_mosaic.version = 11 : i64} {
  func.func @group_model_kernel(%arg0: i32, %arg1: memref<8x128xbf16, #tpu.memory_space<vmem>>, %arg2: memref<128x128xbf16, #tpu.memory_space<vmem>>, %arg3: memref<1x128xf32, #tpu.memory_space<vmem>>, %arg4: memref<128x128xf32, #tpu.memory_space<vmem>>, %arg5: memref<1x128xf32, #tpu.memory_space<vmem>>, %arg6: memref<8x1xi32, #tpu.memory_space<vmem>>, %arg7: memref<8x128xf32, #tpu.memory_space<vmem>>, %arg8: memref<8x1xf32, #tpu.memory_space<vmem>>) attributes {dimension_semantics = [#tpu.dimension_semantics<parallel>], iteration_bounds = array<i64: 1>, scalar_prefetch = 0 : i64, scratch_operands = 0 : i64, tpu.core_type = #tpu.core_type<tc>, window_params = [{transform_indices = @transform_0, window_bounds = array<i64: 8, 128>}, {pipeline_mode = #tpu.pipeline_mode<synchronous>, transform_indices = @transform_1, window_bounds = array<i64: 128, 128>}, {pipeline_mode = #tpu.pipeline_mode<synchronous>, transform_indices = @transform_2, window_bounds = array<i64: 1, 128>}, {pipeline_mode = #tpu.pipeline_mode<synchronous>, transform_indices = @transform_3, window_bounds = array<i64: 128, 128>}, {pipeline_mode = #tpu.pipeline_mode<synchronous>, transform_indices = @transform_4, window_bounds = array<i64: 1, 128>}, {transform_indices = @transform_5, window_bounds = array<i64: 8, 1>}, {transform_indices = @transform_6, window_bounds = array<i64: 8, 128>}, {transform_indices = @transform_7, window_bounds = array<i64: 8, 1>}]} {
    %c0 = arith.constant 0 : index
    %c0_0 = arith.constant 0 : index
    %0 = vector.load %arg1[%c0, %c0_0] : memref<8x128xbf16, #tpu.memory_space<vmem>>, vector<8x128xbf16>
    %c0_1 = arith.constant 0 : index
    %c0_2 = arith.constant 0 : index
    %1 = vector.load %arg2[%c0_1, %c0_2] : memref<128x128xbf16, #tpu.memory_space<vmem>>, vector<128x128xbf16>
    %cst = arith.constant dense<0.000000e+00> : vector<8x128xf32>
    %2 = tpu.matmul %0, %1, %cst {dimension_numbers = #tpu.dot_dimension_numbers<[1], [0], [0], [1], [0, 0, 1, 1], [], []>} : vector<8x128xbf16>, vector<128x128xbf16>, vector<8x128xf32> -> vector<8x128xf32>
    %c0_3 = arith.constant 0 : index
    %c0_4 = arith.constant 0 : index
    %3 = vector.load %arg3[%c0_3, %c0_4] : memref<1x128xf32, #tpu.memory_space<vmem>>, vector<1x128xf32>
    %4 = vector.broadcast %3 : vector<1x128xf32> to vector<8x128xf32>
    %5 = arith.addf %2, %4 : vector<8x128xf32>
    %cst_5 = arith.constant dense<0xFF800000> : vector<8xf32>
    %6 = vector.multi_reduction <maximumf>, %5, %cst_5 [1] : vector<8x128xf32> to vector<8xf32>
    %7 = vector.shape_cast %6 : vector<8xf32> to vector<8x1xf32>
    %8 = tpu.iota {dimensions = array<i32: 1>} : vector<8x128xi32>
    %9 = vector.broadcast %7 : vector<8x1xf32> to vector<8x128xf32>
    %10 = arith.cmpf oeq, %5, %9 : vector<8x128xf32>
    %c128_i32 = arith.constant 128 : i32
    %11 = vector.broadcast %c128_i32 : i32 to vector<8x128xi32>
    %12 = arith.select %10, %8, %11 : vector<8x128xi1>, vector<8x128xi32>
    %cst_6 = arith.constant dense<2147483647> : vector<8xi32>
    %13 = vector.multi_reduction <minsi>, %12, %cst_6 [1] : vector<8x128xi32> to vector<8xi32>
    %14 = vector.shape_cast %13 : vector<8xi32> to vector<8x1xi32>
    %15 = vector.broadcast %14 : vector<8x1xi32> to vector<8x128xi32>
    %16 = arith.cmpi eq, %8, %15 : vector<8x128xi32>
    %17 = arith.extui %16 : vector<8x128xi1> to vector<8x128xi32>
    %18 = arith.sitofp %17 : vector<8x128xi32> to vector<8x128xf32>
    %19 = vector.broadcast %7 : vector<8x1xf32> to vector<8x128xf32>
    %20 = arith.subf %5, %19 : vector<8x128xf32>
    %21 = math.exp %20 : vector<8x128xf32>
    %cst_7 = arith.constant dense<0.000000e+00> : vector<8xf32>
    %22 = vector.multi_reduction <add>, %21, %cst_7 [1] : vector<8x128xf32> to vector<8xf32>
    %23 = vector.shape_cast %22 : vector<8xf32> to vector<8x1xf32>
    %24 = arith.mulf %21, %20 : vector<8x128xf32>
    %cst_8 = arith.constant dense<0.000000e+00> : vector<8xf32>
    %25 = vector.multi_reduction <add>, %24, %cst_8 [1] : vector<8x128xf32> to vector<8xf32>
    %26 = vector.shape_cast %25 : vector<8xf32> to vector<8x1xf32>
    %27 = arith.divf %26, %23 : vector<8x1xf32>
    %28 = math.log %23 : vector<8x1xf32>
    %29 = arith.subf %27, %28 : vector<8x1xf32>
    %c0_9 = arith.constant 0 : index
    %c0_10 = arith.constant 0 : index
    %30 = vector.load %arg4[%c0_9, %c0_10] : memref<128x128xf32, #tpu.memory_space<vmem>>, vector<128x128xf32>
    %cst_11 = arith.constant dense<0.000000e+00> : vector<8x128xf32>
    %31 = tpu.matmul %18, %30, %cst_11 {dimension_numbers = #tpu.dot_dimension_numbers<[1], [0], [0], [1], [0, 0, 1, 1], [], []>} : vector<8x128xf32>, vector<128x128xf32>, vector<8x128xf32> -> vector<8x128xf32>
    %c0_12 = arith.constant 0 : index
    %c0_13 = arith.constant 0 : index
    %32 = vector.load %arg5[%c0_12, %c0_13] : memref<1x128xf32, #tpu.memory_space<vmem>>, vector<1x128xf32>
    %33 = vector.broadcast %32 : vector<1x128xf32> to vector<8x128xf32>
    %34 = arith.addf %31, %33 : vector<8x128xf32>
    %c0_14 = arith.constant 0 : index
    %c0_15 = arith.constant 0 : index
    %35 = vector.load %arg6[%c0_14, %c0_15] : memref<8x1xi32, #tpu.memory_space<vmem>>, vector<8x1xi32>
    tpu.vector_store %arg6[%c0_14, %c0_15], %14 {strides = array<i32>} : memref<8x1xi32, #tpu.memory_space<vmem>>, vector<8x1xi32>,
    %cst_16 = arith.constant 0.000000e+00 : f32
    %36 = vector.broadcast %cst_16 : f32 to vector<8x128xf32>
    %37 = arith.maximumf %34, %36 : vector<8x128xf32>
    %c0_17 = arith.constant 0 : index
    %c0_18 = arith.constant 0 : index
    %38 = vector.load %arg7[%c0_17, %c0_18] : memref<8x128xf32, #tpu.memory_space<vmem>>, vector<8x128xf32>
    tpu.vector_store %arg7[%c0_17, %c0_18], %37 {strides = array<i32>} : memref<8x128xf32, #tpu.memory_space<vmem>>, vector<8x128xf32>,
    %c0_19 = arith.constant 0 : index
    %c0_20 = arith.constant 0 : index
    %39 = vector.load %arg8[%c0_19, %c0_20] : memref<8x1xf32, #tpu.memory_space<vmem>>, vector<8x1xf32>
    tpu.vector_store %arg8[%c0_19, %c0_20], %29 {strides = array<i32>} : memref<8x1xf32, #tpu.memory_space<vmem>>, vector<8x1xf32>,
    return
  }
  func.func @transform_0(%arg0: i32) -> (i32, i32) {
    %c0_i32 = arith.constant 0 : i32
    %c0_i32_0 = arith.constant 0 : i32
    return %arg0, %c0_i32 : i32, i32
  }
  func.func @transform_1(%arg0: i32) -> (i32, i32) {
    %c0_i32 = arith.constant 0 : i32
    %c0_i32_0 = arith.constant 0 : i32
    %c0_i32_1 = arith.constant 0 : i32
    return %c0_i32, %c0_i32_0 : i32, i32
  }
  func.func @transform_2(%arg0: i32) -> (i32, i32) {
    %c0_i32 = arith.constant 0 : i32
    %c0_i32_0 = arith.constant 0 : i32
    %c0_i32_1 = arith.constant 0 : i32
    return %c0_i32, %c0_i32_0 : i32, i32
  }
  func.func @transform_3(%arg0: i32) -> (i32, i32) {
    %c0_i32 = arith.constant 0 : i32
    %c0_i32_0 = arith.constant 0 : i32
    %c0_i32_1 = arith.constant 0 : i32
    return %c0_i32, %c0_i32_0 : i32, i32
  }
  func.func @transform_4(%arg0: i32) -> (i32, i32) {
    %c0_i32 = arith.constant 0 : i32
    %c0_i32_0 = arith.constant 0 : i32
    %c0_i32_1 = arith.constant 0 : i32
    return %c0_i32, %c0_i32_0 : i32, i32
  }
  func.func @transform_5(%arg0: i32) -> (i32, i32) {
    %c0_i32 = arith.constant 0 : i32
    %c0_i32_0 = arith.constant 0 : i32
    return %arg0, %c0_i32 : i32, i32
  }
  func.func @transform_6(%arg0: i32) -> (i32, i32) {
    %c0_i32 = arith.constant 0 : i32
    %c0_i32_0 = arith.constant 0 : i32
    return %arg0, %c0_i32 : i32, i32
  }
  func.func @transform_7(%arg0: i32) -> (i32, i32) {
    %c0_i32 = arith.constant 0 : i32
    %c0_i32_0 = arith.constant 0 : i32
    return %arg0, %c0_i32 : i32, i32
  }
}

</mosaic_0001>

<llo_original>
// kernel: tpu_custom_call.1
$region0: #{tpu_custom_call.1}
  #allocation0 [shape = 'u32[]', space=smem, size = 0x4, offset = 0x4, fixed_abs, tag = 'smem constant byte address 0x4 - core index']
  #allocation1 [shape = 'u32[144,128]{1,0:T(1,128)}', space=vmem, size = 0x12000, scoped, tag = 'internal scratch']
  %s0 = inlined_call_operand.hbm [shape: bf16[8,128], index: 0, kind: input, shape index: {}]
  %s1 = inlined_call_operand.hbm [shape: bf16[128,128], index: 1, kind: input, shape index: {}]
  %s2 = inlined_call_operand.vmem [shape: f32[1,128], index: 2, kind: input, shape index: {}]
  %s3 = inlined_call_operand.hbm [shape: f32[128,128], index: 3, kind: input, shape index: {}]
  %s4 = inlined_call_operand.vmem [shape: f32[1,128], index: 4, kind: input, shape index: {}]
  %s5 = inlined_call_operand.vmem [shape: s32[8,1], index: 5, kind: output, shape index: {0}]
  %s6 = inlined_call_operand.hbm [shape: f32[8,128], index: 6, kind: output, shape index: {1}]
  %s7 = inlined_call_operand.vmem [shape: f32[8,1], index: 7, kind: output, shape index: {2}]
  %8 = xla_tuple %s5, %s6, %s7
  %s9 = sld [smem:[#allocation0]]
  $region58: #{tpu_custom_call.1} parent=0
    _
  %s11 = ssub.s32 1, %s9
  %s12 = scalar_select 0, %s11, %s9
  $region1: #{tpu_custom_call.1} parent=0
    #allocation2 [shape = 'u8[2048]{0}', space=vmem, size = 0x800, scoped, tag = 'input window, operand 0, single buffered']
    #allocation3 [shape = 's32[1]{0}', space=sflag, size = 0x4, scoped, tag = 'scoped memory for tpu_custom_call.1']
    #allocation4 [shape = 's32[1]{0}', space=sflag, size = 0x4, scoped, tag = 'scoped memory for tpu_custom_call.1']
    #allocation5 [shape = 'u8[32768]{0}', space=vmem, size = 0x8000, scoped, tag = 'input window, operand 1, single buffered']
    #allocation6 [shape = 's32[1]{0}', space=sflag, size = 0x4, scoped, tag = 'scoped memory for tpu_custom_call.1']
    #allocation7 [shape = 'u8[65536]{0}', space=vmem, size = 0x10000, scoped, tag = 'input window, operand 3, single buffered']
    #allocation8 [shape = 'u8[4096]{0}', space=vmem, size = 0x1000, scoped, tag = 'output window, operand 1, single buffered']
    %13 = vsyncpa [#allocation3], 0
    %14 = vsyncpa [#allocation6], 0
    %15 = vsyncpa [#allocation4], 0
    // Predicated region
    $region2: #{tpu_custom_call.1} parent=1 // pred_check
      _
    $region3: #{tpu_custom_call.1} parent=1 // pred_check_branch
      %17 = sbr.rel (0) target = $region5
    $region4: #{tpu_custom_call.1} parent=1 // pred_region
      %s19 = ssub.s32 64, 64
      %20 = vsyncadd [#allocation3], %s19
      %s22 = sshll.u32 [#allocation2], 4
      %s23 = int_to_ptr.vmem [resolvable:$true] %s22
      %25 = dma.hbm_to_vmem [thread:$0]  %s0, 64, %s23, [#allocation3]
    $region5: #{tpu_custom_call.1} parent=1 // pred_fallthru
      _
    // Predicated region
    $region6: #{tpu_custom_call.1} parent=1 // pred_check
      _
    $region7: #{tpu_custom_call.1} parent=1 // pred_check_branch
      %27 = sbr.rel (0) target = $region9
    $region8: #{tpu_custom_call.1} parent=1 // pred_region
      %s29 = ssub.s32 1024, 1024
      %30 = vsyncadd [#allocation6], %s29
      %s31 = sshll.u32 [#allocation5], 4
      %s32 = int_to_ptr.vmem [resolvable:$true] %s31
      %37 = dma.hbm_to_vmem [thread:$0]  %s1, 1024, %s32, [#allocation6], 64, 64, 4
    $region9: #{tpu_custom_call.1} parent=1 // pred_fallthru
      _
    // Predicated region
    $region10: #{tpu_custom_call.1} parent=1 // pred_check
      _
    $region11: #{tpu_custom_call.1} parent=1 // pred_check_branch
      %39 = sbr.rel (0) target = $region13
    $region12: #{tpu_custom_call.1} parent=1 // pred_region
      _
    $region13: #{tpu_custom_call.1} parent=1 // pred_fallthru
      _
    // Predicated region
    $region14: #{tpu_custom_call.1} parent=1 // pred_check
      _
    $region15: #{tpu_custom_call.1} parent=1 // pred_check_branch
      %41 = sbr.rel (0) target = $region17
    $region16: #{tpu_custom_call.1} parent=1 // pred_region
      %s43 = ssub.s32 2048, 2048
      %44 = vsyncadd [#allocation6], %s43
      %s45 = sshll.u32 [#allocation7], 4
      %s46 = int_to_ptr.vmem [resolvable:$true] %s45
      %51 = dma.hbm_to_vmem [thread:$0]  %s3, 2048, %s46, [#allocation6], 128, 128, 8
    $region17: #{tpu_custom_call.1} parent=1 // pred_fallthru
      _
    // Predicated region
    $region18: #{tpu_custom_call.1} parent=1 // pred_check
      _
    $region19: #{tpu_custom_call.1} parent=1 // pred_check_branch
      %53 = sbr.rel (0) target = $region21
    $region20: #{tpu_custom_call.1} parent=1 // pred_region
      _
    $region21: #{tpu_custom_call.1} parent=1 // pred_fallthru
      _
    // Predicated region
    $region22: #{tpu_custom_call.1} parent=1 // pred_check
      _
    $region23: #{tpu_custom_call.1} parent=1 // pred_check_branch
      %55 = sbr.rel (0) target = $region25
    $region24: #{tpu_custom_call.1} parent=1 // pred_region
      %56 = dma.done [#allocation3], 64
    $region25: #{tpu_custom_call.1} parent=1 // pred_fallthru
      _
    // Predicated region
    $region26: #{tpu_custom_call.1} parent=1 // pred_check
      _
    $region27: #{tpu_custom_call.1} parent=1 // pred_check_branch
      %58 = sbr.rel (0) target = $region29
    $region28: #{tpu_custom_call.1} parent=1 // pred_region
      %59 = dma.done [#allocation6], 1024
    $region29: #{tpu_custom_call.1} parent=1 // pred_fallthru
      _
    // Predicated region
    $region30: #{tpu_custom_call.1} parent=1 // pred_check
      _
    $region31: #{tpu_custom_call.1} parent=1 // pred_check_branch
      %61 = sbr.rel (0) target = $region33
    $region32: #{tpu_custom_call.1} parent=1 // pred_region
      %62 = dma.done [#allocation6], 2048
    $region33: #{tpu_custom_call.1} parent=1 // pred_fallthru
      _
    %v64 = vld [vmem:[#allocation2] sm:$0xf]
    %v65 = vld [vmem:[#allocation5] sm:$0xf]
    %v66 = vld [vmem:[#allocation5 + $0x4] sm:$0xf]
    %v67 = vld [vmem:[#allocation5 + $0x8] sm:$0xf]
    %v68 = vld [vmem:[#allocation5 + $0xc] sm:$0xf]
    %v69 = vld [vmem:[#allocation5 + $0x10] sm:$0xf]
    %v70 = vld [vmem:[#allocation5 + $0x14] sm:$0xf]
    %v71 = vld [vmem:[#allocation5 + $0x18] sm:$0xf]
    %v72 = vld [vmem:[#allocation5 + $0x1c] sm:$0xf]
    %v73 = vld [vmem:[#allocation5 + $0x20] sm:$0xf]
    %v74 = vld [vmem:[#allocation5 + $0x24] sm:$0xf]
    %v75 = vld [vmem:[#allocation5 + $0x28] sm:$0xf]
    %v76 = vld [vmem:[#allocation5 + $0x2c] sm:$0xf]
    %v77 = vld [vmem:[#allocation5 + $0x30] sm:$0xf]
    %v78 = vld [vmem:[#allocation5 + $0x34] sm:$0xf]
    %v79 = vld [vmem:[#allocation5 + $0x38] sm:$0xf]
    %v80 = vld [vmem:[#allocation5 + $0x3c] sm:$0xf]
    %v81 = vld [vmem:[%s2] sm:$0x1]
    %v83 = vlaneseq
    %v84 = vshrl.u32 %v83, 7
    %v85 = vsub.s32 0, %v84
    %v86 = vrot.slane %v81, %v85
    %v104 = vunpack.c.l.b16 %v65
    %v105 = vunpack.c.l.b16 %v66
    %v106 = vunpack.c.l.b16 %v67
    %v107 = vunpack.c.l.b16 %v68
    %v108 = vunpack.c.l.b16 %v69
    %v109 = vunpack.c.l.b16 %v70
    %v110 = vunpack.c.l.b16 %v71
    %v111 = vunpack.c.l.b16 %v72
    %v112 = vunpack.c.l.b16 %v73
    %v113 = vunpack.c.l.b16 %v74
    %v114 = vunpack.c.l.b16 %v75
    %v115 = vunpack.c.l.b16 %v76
    %v116 = vunpack.c.l.b16 %v77
    %v117 = vunpack.c.l.b16 %v78
    %v118 = vunpack.c.l.b16 %v79
    %v119 = vunpack.c.l.b16 %v80
    %v120 = vpack.c.b16 %v105, %v104
    %v121 = vpack.c.b16 %v107, %v106
    %v122 = vpack.c.b16 %v109, %v108
    %v123 = vpack.c.b16 %v111, %v110
    %v124 = vpack.c.b16 %v113, %v112
    %v125 = vpack.c.b16 %v115, %v114
    %v126 = vpack.c.b16 %v117, %v116
    %v127 = vpack.c.b16 %v119, %v118
    %136 = vmatprep.subr.bf16.mxu0 0
    %137 = vmatpush1.bf16.msra.mxu0 %v127
    %138 = vmatprep.subr.bf16.mxu0 0
    %139 = vmatpush1.bf16.msra.mxu0 %v126
    %140 = vmatprep.subr.bf16.mxu0 0
    %141 = vmatpush1.bf16.msra.mxu0 %v125
    %142 = vmatprep.subr.bf16.mxu0 0
    %143 = vmatpush1.bf16.msra.mxu0 %v124
    %144 = vmatprep.subr.bf16.mxu0 0
    %145 = vmatpush1.bf16.msra.mxu0 %v123
    %146 = vmatprep.subr.bf16.mxu0 0
    %147 = vmatpush1.bf16.msra.mxu0 %v122
    %148 = vmatprep.subr.bf16.mxu0 0
    %149 = vmatpush1.bf16.msra.mxu0 %v121
    %150 = vmatprep.subr.bf16.mxu0 0
    %151 = vmatpush1.bf16.msra.mxu0 %v120
    %152 = vmatprep.subr.bf16.mxu0 0
    %153 = vmatpush2.bf16.msra.mxu0 0
    %154 = vmatprep.subr.bf16.mxu0 0
    %155 = vmatpush2.bf16.msra.mxu0 0
    %156 = vmatprep.subr.bf16.mxu0 0
    %157 = vmatpush2.bf16.msra.mxu0 0
    %158 = vmatprep.subr.bf16.mxu0 0
    %159 = vmatpush2.bf16.msra.mxu0 0
    %160 = vmatprep.subr.bf16.mxu0 0
    %161 = vmatpush2.bf16.msra.mxu0 0
    %162 = vmatprep.subr.bf16.mxu0 0
    %163 = vmatpush2.bf16.msra.mxu0 0
    %164 = vmatprep.subr.bf16.mxu0 0
    %165 = vmatpush2.bf16.msra.mxu0 0
    %166 = vmatprep.subr.bf16.mxu0 0
    %167 = vmatpush2.bf16.msra.mxu0 0
    %168 = vmatprep.mubr.bf16.mxu0 0
    %169 = vmatmul.mubr.bf16.gmra.mxu0 %v64
    %v170 = vpop.f32.mrf.mxu0
    %v171 = vadd.f32 %v86, %v170
    %v172 = vpop.f32.mrf.mxu0
    %v173 = vpop.f32.mrf.mxu0
    %v174 = vpop.f32.mrf.mxu0
    %175 = vdwg.mxu0
    %176 = vmax.xlane.f32.xlu0 %v171
    %v177 = vpop.xlane.xlu0 %176
    %v178 = vlaneseq
    %v179 = vand.u32 %v178, 127
    %vm180 = vcmp.eq.f32.partialorder %v171, %v177
    %v181 = vsel %vm180, %v179, 128
    %v182 = vand.u32 %v181, 65535
    %v183 = vshra.s32 %v181, 16
    %v184 = vcvt.s32.f32 %v182
    %v185 = vcvt.s32.f32 %v183
    %186 = vmin.xlane.f32.xlu0 %v185
    %v187 = vpop.xlane.xlu0 %186
    %vm188 = vcmp.eq.f32.partialorder %v185, %v187
    %v189 = vsel %vm188, %v184, inf
    %190 = vmin.xlane.f32.xlu0 %v189
    %v191 = vpop.xlane.xlu0 %190
    %v192 = vcvt.f32.s32 %v191
    %v193 = vcvt.f32.s32 %v187
    %v194 = vshll.u32 %v193, 16
    %v195 = vadd.s32 %v194, %v192
    %vm196 = vcmp.eq.s32.totalorder %v179, %v195
    %v197 = vsel %vm196, 1, 0
    %v198 = vcvt.s32.f32 %v197
    %v199 = vsub.f32 %v171, %v177
    %v200 = vmul.f32 %v199, 1.442695
    %v201 = vpow.pop %v200
    %202 = vadd.xlane.f32.xlu0 %v201
    %v203 = vpop.xlane.xlu0 %202
    %v204 = vmul.f32 %v201, %v199
    %205 = vadd.xlane.f32.xlu0 %v204
    %v206 = vpop.xlane.xlu0 %205
    %v207 = vrcp.pop %v203
    %v208 = vmul.f32 %v206, %v207
    %v209 = vlog2.pop %v203
    %v210 = vmul.f32 %v209, 0.6931472
    %v211 = vsub.f32 %v208, %v210
    %v212 = vld [vmem:[#allocation7] sm:$0xff]
    %v213 = vld [vmem:[#allocation7 + $0x8] sm:$0xff]
    %v214 = vld [vmem:[#allocation7 + $0x10] sm:$0xff]
    %v215 = vld [vmem:[#allocation7 + $0x18] sm:$0xff]
    %v216 = vld [vmem:[#allocation7 + $0x20] sm:$0xff]
    %v217 = vld [vmem:[#allocation7 + $0x28] sm:$0xff]
    %v218 = vld [vmem:[#allocation7 + $0x30] sm:$0xff]
    %v219 = vld [vmem:[#allocation7 + $0x38] sm:$0xff]
    %v220 = vld [vmem:[#allocation7 + $0x40] sm:$0xff]
    %v221 = vld [vmem:[#allocation7 + $0x48] sm:$0xff]
    %v222 = vld [vmem:[#allocation7 + $0x50] sm:$0xff]
    %v223 = vld [vmem:[#allocation7 + $0x58] sm:$0xff]
    %v224 = vld [vmem:[#allocation7 + $0x60] sm:$0xff]
    %v225 = vld [vmem:[#allocation7 + $0x68] sm:$0xff]
    %v226 = vld [vmem:[#allocation7 + $0x70] sm:$0xff]
    %v227 = vld [vmem:[#allocation7 + $0x78] sm:$0xff]
    %v228 = vld [vmem:[%s4] sm:$0x1]
    %v230 = vlaneseq
    %v231 = vshrl.u32 %v230, 7
    %v232 = vsub.s32 0, %v231
    %v233 = vrot.slane %v228, %v232
    %235 = vmatprep.subr.mxu0 0.0
    %236 = vmatpush1.msra.mxu0 %v227
    %237 = vmatprep.subr.mxu0 0.0
    %238 = vmatpush1.msra.mxu0 %v226
    %239 = vmatprep.subr.mxu0 0.0
    %240 = vmatpush1.msra.mxu0 %v225
    %241 = vmatprep.subr.mxu0 0.0
    %242 = vmatpush1.msra.mxu0 %v224
    %243 = vmatprep.subr.mxu0 0.0
    %244 = vmatpush1.msra.mxu0 %v223
    %245 = vmatprep.subr.mxu0 0.0
    %246 = vmatpush1.msra.mxu0 %v222
    %247 = vmatprep.subr.mxu0 0.0
    %248 = vmatpush1.msra.mxu0 %v221
    %249 = vmatprep.subr.mxu0 0.0
    %250 = vmatpush1.msra.mxu0 %v220
    %251 = vmatprep.subr.mxu0 0.0
    %252 = vmatpush1.msra.mxu0 %v219
    %253 = vmatprep.subr.mxu0 0.0
    %254 = vmatpush1.msra.mxu0 %v218
    %255 = vmatprep.subr.mxu0 0.0
    %256 = vmatpush1.msra.mxu0 %v217
    %257 = vmatprep.subr.mxu0 0.0
    %258 = vmatpush1.msra.mxu0 %v216
    %259 = vmatprep.subr.mxu0 0.0
    %260 = vmatpush1.msra.mxu0 %v215
    %261 = vmatprep.subr.mxu0 0.0
    %262 = vmatpush1.msra.mxu0 %v214
    %263 = vmatprep.subr.mxu0 0.0
    %264 = vmatpush1.msra.mxu0 %v213
    %265 = vmatprep.subr.mxu0 0.0
    %266 = vmatpush1.msra.mxu0 %v212
    %267 = vmatprep.subr.mxu0 0.0
    %268 = vmatpush2.msra.mxu0 0.0
    %269 = vmatprep.subr.mxu0 0.0
    %270 = vmatpush2.msra.mxu0 0.0
    %271 = vmatprep.subr.mxu0 0.0
    %272 = vmatpush2.msra.mxu0 0.0
    %273 = vmatprep.subr.mxu0 0.0
    %274 = vmatpush2.msra.mxu0 0.0
    %275 = vmatprep.subr.mxu0 0.0
    %276 = vmatpush2.msra.mxu0 0.0
    %277 = vmatprep.subr.mxu0 0.0
    %278 = vmatpush2.msra.mxu0 0.0
    %279 = vmatprep.subr.mxu0 0.0
    %280 = vmatpush2.msra.mxu0 0.0
    %281 = vmatprep.subr.mxu0 0.0
    %282 = vmatpush2.msra.mxu0 0.0
    %283 = vmatprep.subr.mxu0 0.0
    %284 = vmatpush2.msra.mxu0 0.0
    %285 = vmatprep.subr.mxu0 0.0
    %286 = vmatpush2.msra.mxu0 0.0
    %287 = vmatprep.subr.mxu0 0.0
    %288 = vmatpush2.msra.mxu0 0.0
    %289 = vmatprep.subr.mxu0 0.0
    %290 = vmatpush2.msra.mxu0 0.0
    %291 = vmatprep.subr.mxu0 0.0
    %292 = vmatpush2.msra.mxu0 0.0
    %293 = vmatprep.subr.mxu0 0.0
    %294 = vmatpush2.msra.mxu0 0.0
    %295 = vmatprep.subr.mxu0 0.0
    %296 = vmatpush2.msra.mxu0 0.0
    %297 = vmatprep.subr.mxu0 0.0
    %298 = vmatpush2.msra.mxu0 0.0
    %299 = vmatprep.mubr.f32.mxu0 0.0
    %300 = vmatmul.mubr.f32.gmra.mxu0 %v198
    %v301 = vpop.f32.mrf.mxu0
    %v302 = vadd.f32 %v233, %v301
    %v303 = vpop.f32.mrf.mxu0
    %304 = vdwg.mxu0
    %vm305 = vcmask 7168
    %306 = vst.msk [vmem:[%s5] sm:$0xff] %vm305, %v195
    %v307 = vmax.f32 %v302, 0.0
    %308 = vst [vmem:[#allocation8] sm:$0xff] %v307
    %309 = vst.msk [vmem:[%s7] sm:$0xff] %vm305, %v211
    // Predicated region
    $region34: #{tpu_custom_call.1} parent=1 // pred_check
      _
    $region35: #{tpu_custom_call.1} parent=1 // pred_check_branch
      %311 = sbr.rel (0) target = $region37
    $region36: #{tpu_custom_call.1} parent=1 // pred_region
      _
    $region37: #{tpu_custom_call.1} parent=1 // pred_fallthru
      _
    // Predicated region
    $region38: #{tpu_custom_call.1} parent=1 // pred_check
      _
    $region39: #{tpu_custom_call.1} parent=1 // pred_check_branch
      %313 = sbr.rel (0) target = $region41
    $region40: #{tpu_custom_call.1} parent=1 // pred_region
      %s315 = ssub.s32 128, 128
      %316 = vsyncadd [#allocation4], %s315
      %s318 = sshll.u32 [#allocation8], 4
      %s319 = int_to_ptr.vmem [resolvable:$true] %s318
      %321 = dma.vmem_to_hbm [thread:$0]  %s319, 128, %s6, [#allocation4]
    $region41: #{tpu_custom_call.1} parent=1 // pred_fallthru
      _
    // Predicated region
    $region42: #{tpu_custom_call.1} parent=1 // pred_check
      _
    $region43: #{tpu_custom_call.1} parent=1 // pred_check_branch
      %323 = sbr.rel (0) target = $region45
    $region44: #{tpu_custom_call.1} parent=1 // pred_region
      _
    $region45: #{tpu_custom_call.1} parent=1 // pred_fallthru
      _
    // Predicated region
    $region46: #{tpu_custom_call.1} parent=1 // pred_check
      _
    $region47: #{tpu_custom_call.1} parent=1 // pred_check_branch
      %325 = sbr.rel (0) target = $region49
    $region48: #{tpu_custom_call.1} parent=1 // pred_region
      _
    $region49: #{tpu_custom_call.1} parent=1 // pred_fallthru
      _
    // Predicated region
    $region50: #{tpu_custom_call.1} parent=1 // pred_check
      _
    $region51: #{tpu_custom_call.1} parent=1 // pred_check_branch
      %327 = sbr.rel (0) target = $region53
    $region52: #{tpu_custom_call.1} parent=1 // pred_region
      %328 = dma.done [#allocation4], 128
    $region53: #{tpu_custom_call.1} parent=1 // pred_fallthru
      _
    // Predicated region
    $region54: #{tpu_custom_call.1} parent=1 // pred_check
      _
    $region55: #{tpu_custom_call.1} parent=1 // pred_check_branch
      %330 = sbr.rel (0) target = $region57
    $region56: #{tpu_custom_call.1} parent=1 // pred_region
      _
    $region57: #{tpu_custom_call.1} parent=1 // pred_fallthru
      _
    %331 = vsyncpa [#allocation3], 1
    %332 = vsyncpa [#allocation6], 1
    %333 = vsyncpa [#allocation4], 1

// kernel: tpu_custom_call.1
$region0: #{tpu_custom_call.1}
  #allocation0 [shape = 'u32[]', space=smem, size = 0x4, offset = 0x4, fixed_abs, tag = 'smem constant byte address 0x4 - core index']
  #allocation1 [shape = 'u32[144,128]{1,0:T(1,128)}', space=vmem, size = 0x12000, scoped, tag = 'internal scratch']
  %s0 = inlined_call_operand.hbm [shape: bf16[8,128], index: 0, kind: input, shape index: {}]
  %s1 = inlined_call_operand.hbm [shape: bf16[128,128], index: 1, kind: input, shape index: {}]
  %s2 = inlined_call_operand.vmem [shape: f32[1,128], index: 2, kind: input, shape index: {}]
  %s3 = inlined_call_operand.hbm [shape: f32[128,128], index: 3, kind: input, shape index: {}]
  %s4 = inlined_call_operand.vmem [shape: f32[1,128], index: 4, kind: input, shape index: {}]
  %s5 = inlined_call_operand.vmem [shape: s32[8,1], index: 5, kind: output, shape index: {0}]
  %s6 = inlined_call_operand.hbm [shape: f32[8,128], index: 6, kind: output, shape index: {1}]
  %s7 = inlined_call_operand.vmem [shape: f32[8,1], index: 7, kind: output, shape index: {2}]
  %8 = xla_tuple %s5, %s6, %s7
  %s9 = sld [smem:[#allocation0]]
  $region58: #{tpu_custom_call.1} parent=0
    _
  %s11 = ssub.s32 1, %s9
  %s12 = scalar_select 0, %s11, %s9
  $region1: #{tpu_custom_call.1} parent=0
    #allocation2 [shape = 'u8[2048]{0}', space=vmem, size = 0x800, scoped, tag = 'input window, operand 0, single buffered']
    #allocation3 [shape = 's32[1]{0}', space=sflag, size = 0x4, scoped, tag = 'scoped memory for tpu_custom_call.1']
    #allocation4 [shape = 's32[1]{0}', space=sflag, size = 0x4, scoped, tag = 'scoped memory for tpu_custom_call.1']
    #allocation5 [shape = 'u8[32768]{0}', space=vmem, size = 0x8000, scoped, tag = 'input window, operand 1, single buffered']
    #allocation6 [shape = 's32[1]{0}', space=sflag, size = 0x4, scoped, tag = 'scoped memory for tpu_custom_call.1']
    #allocation7 [shape = 'u8[65536]{0}', space=vmem, size = 0x10000, scoped, tag = 'input window, operand 3, single buffered']
    #allocation8 [shape = 'u8[4096]{0}', space=vmem, size = 0x1000, scoped, tag = 'output window, operand 1, single buffered']
    %13 = vsyncpa [#allocation3], 0
    %14 = vsyncpa [#allocation6], 0
    %15 = vsyncpa [#allocation4], 0
    // Predicated region
    $region2: #{tpu_custom_call.1} parent=1 // pred_check
      _
    $region3: #{tpu_custom_call.1} parent=1 // pred_check_branch
      %17 = sbr.rel (0) target = $region5
    $region4: #{tpu_custom_call.1} parent=1 // pred_region
      %s19 = ssub.s32 64, 64
      %20 = vsyncadd [#allocation3], %s19
      %s22 = sshll.u32 [#allocation2], 4
      %s23 = int_to_ptr.vmem [resolvable:$true] %s22
      %25 = dma.hbm_to_vmem [thread:$0]  %s0, 64, %s23, [#allocation3]
    $region5: #{tpu_custom_call.1} parent=1 // pred_fallthru
      _
    // Predicated region
    $region6: #{tpu_custom_call.1} parent=1 // pred_check
      _
    $region7: #{tpu_custom_call.1} parent=1 // pred_check_branch
      %27 = sbr.rel (0) target = $region9
    $region8: #{tpu_custom_call.1} parent=1 // pred_region
      %s29 = ssub.s32 1024, 1024
      %30 = vsyncadd [#allocation6], %s29
      %s31 = sshll.u32 [#allocation5], 4
      %s32 = int_to_ptr.vmem [resolvable:$true] %s31
      %37 = dma.hbm_to_vmem [thread:$0]  %s1, 1024, %s32, [#allocation6], 64, 64, 4
    $region9: #{tpu_custom_call.1} parent=1 // pred_fallthru
      _
    // Predicated region
    $region10: #{tpu_custom_call.1} parent=1 // pred_check
      _
    $region11: #{tpu_custom_call.1} parent=1 // pred_check_branch
      %39 = sbr.rel (0) target = $region13
    $region12: #{tpu_custom_call.1} parent=1 // pred_region
      _
    $region13: #{tpu_custom_call.1} parent=1 // pred_fallthru
      _
    // Predicated region
    $region14: #{tpu_custom_call.1} parent=1 // pred_check
      _
    $region15: #{tpu_custom_call.1} parent=1 // pred_check_branch
      %41 = sbr.rel (0) target = $region17
    $region16: #{tpu_custom_call.1} parent=1 // pred_region
      %s43 = ssub.s32 2048, 2048
      %44 = vsyncadd [#allocation6], %s43
      %s45 = sshll.u32 [#allocation7], 4
      %s46 = int_to_ptr.vmem [resolvable:$true] %s45
      %51 = dma.hbm_to_vmem [thread:$0]  %s3, 2048, %s46, [#allocation6], 128, 128, 8
    $region17: #{tpu_custom_call.1} parent=1 // pred_fallthru
      _
    // Predicated region
    $region18: #{tpu_custom_call.1} parent=1 // pred_check
      _
    $region19: #{tpu_custom_call.1} parent=1 // pred_check_branch
      %53 = sbr.rel (0) target = $region21
    $region20: #{tpu_custom_call.1} parent=1 // pred_region
      _
    $region21: #{tpu_custom_call.1} parent=1 // pred_fallthru
      _
    // Predicated region
    $region22: #{tpu_custom_call.1} parent=1 // pred_check
      _
    $region23: #{tpu_custom_call.1} parent=1 // pred_check_branch
      %55 = sbr.rel (0) target = $region25
    $region24: #{tpu_custom_call.1} parent=1 // pred_region
      %56 = dma.done [#allocation3], 64
    $region25: #{tpu_custom_call.1} parent=1 // pred_fallthru
      _
    // Predicated region
    $region26: #{tpu_custom_call.1} parent=1 // pred_check
      _
    $region27: #{tpu_custom_call.1} parent=1 // pred_check_branch
      %58 = sbr.rel (0) target = $region29
    $region28: #{tpu_custom_call.1} parent=1 // pred_region
      %59 = dma.done [#allocation6], 1024
    $region29: #{tpu_custom_call.1} parent=1 // pred_fallthru
      _
    // Predicated region
    $region30: #{tpu_custom_call.1} parent=1 // pred_check
      _
    $region31: #{tpu_custom_call.1} parent=1 // pred_check_branch
      %61 = sbr.rel (0) target = $region33
    $region32: #{tpu_custom_call.1} parent=1 // pred_region
      %62 = dma.done [#allocation6], 2048
    $region33: #{tpu_custom_call.1} parent=1 // pred_fallthru
      _
    %v64 = vld [vmem:[#allocation2] sm:$0xf]
    %v65 = vld [vmem:[#allocation5] sm:$0xf]
    %v66 = vld [vmem:[#allocation5 + $0x4] sm:$0xf]
    %v67 = vld [vmem:[#allocation5 + $0x8] sm:$0xf]
    %v68 = vld [vmem:[#allocation5 + $0xc] sm:$0xf]
    %v69 = vld [vmem:[#allocation5 + $0x10] sm:$0xf]
    %v70 = vld [vmem:[#allocation5 + $0x14] sm:$0xf]
    %v71 = vld [vmem:[#allocation5 + $0x18] sm:$0xf]
    %v72 = vld [vmem:[#allocation5 + $0x1c] sm:$0xf]
    %v73 = vld [vmem:[#allocation5 + $0x20] sm:$0xf]
    %v74 = vld [vmem:[#allocation5 + $0x24] sm:$0xf]
    %v75 = vld [vmem:[#allocation5 + $0x28] sm:$0xf]
    %v76 = vld [vmem:[#allocation5 + $0x2c] sm:$0xf]
    %v77 = vld [vmem:[#allocation5 + $0x30] sm:$0xf]
    %v78 = vld [vmem:[#allocation5 + $0x34] sm:$0xf]
    %v79 = vld [vmem:[#allocation5 + $0x38] sm:$0xf]
    %v80 = vld [vmem:[#allocation5 + $0x3c] sm:$0xf]
    %v81 = vld [vmem:[%s2] sm:$0x1]
    %v83 = vlaneseq
    %v84 = vshrl.u32 %v83, 7
    %v85 = vsub.s32 0, %v84
    %v86 = vrot.slane %v81, %v85
    %v104 = vunpack.c.l.b16 %v65
    %v105 = vunpack.c.l.b16 %v66
    %v106 = vunpack.c.l.b16 %v67
    %v107 = vunpack.c.l.b16 %v68
    %v108 = vunpack.c.l.b16 %v69
    %v109 = vunpack.c.l.b16 %v70
    %v110 = vunpack.c.l.b16 %v71
    %v111 = vunpack.c.l.b16 %v72
    %v112 = vunpack.c.l.b16 %v73
    %v113 = vunpack.c.l.b16 %v74
    %v114 = vunpack.c.l.b16 %v75
    %v115 = vunpack.c.l.b16 %v76
    %v116 = vunpack.c.l.b16 %v77
    %v117 = vunpack.c.l.b16 %v78
    %v118 = vunpack.c.l.b16 %v79
    %v119 = vunpack.c.l.b16 %v80
    %v120 = vpack.c.b16 %v105, %v104
    %v121 = vpack.c.b16 %v107, %v106
    %v122 = vpack.c.b16 %v109, %v108
    %v123 = vpack.c.b16 %v111, %v110
    %v124 = vpack.c.b16 %v113, %v112
    %v125 = vpack.c.b16 %v115, %v114
    %v126 = vpack.c.b16 %v117, %v116
    %v127 = vpack.c.b16 %v119, %v118
    %136 = vmatprep.subr.bf16.mxu0 0
    %137 = vmatpush1.bf16.msra.mxu0 %v127
    %138 = vmatprep.subr.bf16.mxu0 0
    %139 = vmatpush1.bf16.msra.mxu0 %v126
    %140 = vmatprep.subr.bf16.mxu0 0
    %141 = vmatpush1.bf16.msra.mxu0 %v125
    %142 = vmatprep.subr.bf16.mxu0 0
    %143 = vmatpush1.bf16.msra.mxu0 %v124
    %144 = vmatprep.subr.bf16.mxu0 0
    %145 = vmatpush1.bf16.msra.mxu0 %v123
    %146 = vmatprep.subr.bf16.mxu0 0
    %147 = vmatpush1.bf16.msra.mxu0 %v122
    %148 = vmatprep.subr.bf16.mxu0 0
    %149 = vmatpush1.bf16.msra.mxu0 %v121
    %150 = vmatprep.subr.bf16.mxu0 0
    %151 = vmatpush1.bf16.msra.mxu0 %v120
    %152 = vmatprep.subr.bf16.mxu0 0
    %153 = vmatpush2.bf16.msra.mxu0 0
    %154 = vmatprep.subr.bf16.mxu0 0
    %155 = vmatpush2.bf16.msra.mxu0 0
    %156 = vmatprep.subr.bf16.mxu0 0
    %157 = vmatpush2.bf16.msra.mxu0 0
    %158 = vmatprep.subr.bf16.mxu0 0
    %159 = vmatpush2.bf16.msra.mxu0 0
    %160 = vmatprep.subr.bf16.mxu0 0
    %161 = vmatpush2.bf16.msra.mxu0 0
    %162 = vmatprep.subr.bf16.mxu0 0
    %163 = vmatpush2.bf16.msra.mxu0 0
    %164 = vmatprep.subr.bf16.mxu0 0
    %165 = vmatpush2.bf16.msra.mxu0 0
    %166 = vmatprep.subr.bf16.mxu0 0
    %167 = vmatpush2.bf16.msra.mxu0 0
    %168 = vmatprep.mubr.bf16.mxu0 0
    %169 = vmatmul.mubr.bf16.gmra.mxu0 %v64
    %v170 = vpop.f32.mrf.mxu0
    %v171 = vadd.f32 %v86, %v170
    %v172 = vpop.f32.mrf.mxu0
    %v173 = vpop.f32.mrf.mxu0
    %v174 = vpop.f32.mrf.mxu0
    %175 = vdwg.mxu0
    %176 = vmax.xlane.f32.xlu0 %v171
    %v177 = vpop.xlane.xlu0 %176
    %v178 = vlaneseq
    %v179 = vand.u32 %v178, 127
    %vm180 = vcmp.eq.f32.partialorder %v171, %v177
    %v181 = vsel %vm180, %v179, 128
    %v182 = vand.u32 %v181, 65535
    %v183 = vshra.s32 %v181, 16
    %v184 = vcvt.s32.f32 %v182
    %v185 = vcvt.s32.f32 %v183
    %186 = vmin.xlane.f32.xlu0 %v185
    %v187 = vpop.xlane.xlu0 %186
    %vm188 = vcmp.eq.f32.partialorder %v185, %v187
    %v189 = vsel %vm188, %v184, inf
    %190 = vmin.xlane.f32.xlu0 %v189
    %v191 = vpop.xlane.xlu0 %190
    %v192 = vcvt.f32.s32 %v191
    %v193 = vcvt.f32.s32 %v187
    %v194 = vshll.u32 %v193, 16
    %v195 = vadd.s32 %v194, %v192
    %vm196 = vcmp.eq.s32.totalorder %v179, %v195
    %v197 = vsel %vm196, 1, 0
    %v198 = vcvt.s32.f32 %v197
    %v199 = vsub.f32 %v171, %v177
    %v200 = vmul.f32 %v199, 1.442695
    %v201 = vpow.pop %v200
    %202 = vadd.xlane.f32.xlu0 %v201
    %v203 = vpop.xlane.xlu0 %202
    %v204 = vmul.f32 %v201, %v199
    %205 = vadd.xlane.f32.xlu0 %v204
    %v206 = vpop.xlane.xlu0 %205
    %v207 = vrcp.pop %v203
    %v208 = vmul.f32 %v206, %v207
    %v209 = vlog2.pop %v203
    %v210 = vmul.f32 %v209, 0.6931472
    %v211 = vsub.f32 %v208, %v210
    %v212 = vld [vmem:[#allocation7] sm:$0xff]
    %v213 = vld [vmem:[#allocation7 + $0x8] sm:$0xff]
    %v214 = vld [vmem:[#allocation7 + $0x10] sm:$0xff]
    %v215 = vld [vmem:[#allocation7 + $0x18] sm:$0xff]
    %v216 = vld [vmem:[#allocation7 + $0x20] sm:$0xff]
    %v217 = vld [vmem:[#allocation7 + $0x28] sm:$0xff]
    %v218 = vld [vmem:[#allocation7 + $0x30] sm:$0xff]
    %v219 = vld [vmem:[#allocation7 + $0x38] sm:$0xff]
    %v220 = vld [vmem:[#allocation7 + $0x40] sm:$0xff]
    %v221 = vld [vmem:[#allocation7 + $0x48] sm:$0xff]
    %v222 = vld [vmem:[#allocation7 + $0x50] sm:$0xff]
    %v223 = vld [vmem:[#allocation7 + $0x58] sm:$0xff]
    %v224 = vld [vmem:[#allocation7 + $0x60] sm:$0xff]
    %v225 = vld [vmem:[#allocation7 + $0x68] sm:$0xff]
    %v226 = vld [vmem:[#allocation7 + $0x70] sm:$0xff]
    %v227 = vld [vmem:[#allocation7 + $0x78] sm:$0xff]
    %v228 = vld [vmem:[%s4] sm:$0x1]
    %v230 = vlaneseq
    %v231 = vshrl.u32 %v230, 7
    %v232 = vsub.s32 0, %v231
    %v233 = vrot.slane %v228, %v232
    %235 = vmatprep.subr.mxu0 0.0
    %236 = vmatpush1.msra.mxu0 %v227
    %237 = vmatprep.subr.mxu0 0.0
    %238 = vmatpush1.msra.mxu0 %v226
    %239 = vmatprep.subr.mxu0 0.0
    %240 = vmatpush1.msra.mxu0 %v225
    %241 = vmatprep.subr.mxu0 0.0
    %242 = vmatpush1.msra.mxu0 %v224
    %243 = vmatprep.subr.mxu0 0.0
    %244 = vmatpush1.msra.mxu0 %v223
    %245 = vmatprep.subr.mxu0 0.0
    %246 = vmatpush1.msra.mxu0 %v222
    %247 = vmatprep.subr.mxu0 0.0
    %248 = vmatpush1.msra.mxu0 %v221
    %249 = vmatprep.subr.mxu0 0.0
    %250 = vmatpush1.msra.mxu0 %v220
    %251 = vmatprep.subr.mxu0 0.0
    %252 = vmatpush1.msra.mxu0 %v219
    %253 = vmatprep.subr.mxu0 0.0
    %254 = vmatpush1.msra.mxu0 %v218
    %255 = vmatprep.subr.mxu0 0.0
    %256 = vmatpush1.msra.mxu0 %v217
    %257 = vmatprep.subr.mxu0 0.0
    %258 = vmatpush1.msra.mxu0 %v216
    %259 = vmatprep.subr.mxu0 0.0
    %260 = vmatpush1.msra.mxu0 %v215
    %261 = vmatprep.subr.mxu0 0.0
    %262 = vmatpush1.msra.mxu0 %v214
    %263 = vmatprep.subr.mxu0 0.0
    %264 = vmatpush1.msra.mxu0 %v213
    %265 = vmatprep.subr.mxu0 0.0
    %266 = vmatpush1.msra.mxu0 %v212
    %267 = vmatprep.subr.mxu0 0.0
    %268 = vmatpush2.msra.mxu0 0.0
    %269 = vmatprep.subr.mxu0 0.0
    %270 = vmatpush2.msra.mxu0 0.0
    %271 = vmatprep.subr.mxu0 0.0
    %272 = vmatpush2.msra.mxu0 0.0
    %273 = vmatprep.subr.mxu0 0.0
    %274 = vmatpush2.msra.mxu0 0.0
    %275 = vmatprep.subr.mxu0 0.0
    %276 = vmatpush2.msra.mxu0 0.0
    %277 = vmatprep.subr.mxu0 0.0
    %278 = vmatpush2.msra.mxu0 0.0
    %279 = vmatprep.subr.mxu0 0.0
    %280 = vmatpush2.msra.mxu0 0.0
    %281 = vmatprep.subr.mxu0 0.0
    %282 = vmatpush2.msra.mxu0 0.0
    %283 = vmatprep.subr.mxu0 0.0
    %284 = vmatpush2.msra.mxu0 0.0
    %285 = vmatprep.subr.mxu0 0.0
    %286 = vmatpush2.msra.mxu0 0.0
    %287 = vmatprep.subr.mxu0 0.0
    %288 = vmatpush2.msra.mxu0 0.0
    %289 = vmatprep.subr.mxu0 0.0
    %290 = vmatpush2.msra.mxu0 0.0
    %291 = vmatprep.subr.mxu0 0.0
    %292 = vmatpush2.msra.mxu0 0.0
    %293 = vmatprep.subr.mxu0 0.0
    %294 = vmatpush2.msra.mxu0 0.0
    %295 = vmatprep.subr.mxu0 0.0
    %296 = vmatpush2.msra.mxu0 0.0
    %297 = vmatprep.subr.mxu0 0.0
    %298 = vmatpush2.msra.mxu0 0.0
    %299 = vmatprep.mubr.f32.mxu0 0.0
    %300 = vmatmul.mubr.f32.gmra.mxu0 %v198
    %v301 = vpop.f32.mrf.mxu0
    %v302 = vadd.f32 %v233, %v301
    %v303 = vpop.f32.mrf.mxu0
    %304 = vdwg.mxu0
    %vm305 = vcmask 7168
    %306 = vst.msk [vmem:[%s5] sm:$0xff] %vm305, %v195
    %v307 = vmax.f32 %v302, 0.0
    %308 = vst [vmem:[#allocation8] sm:$0xff] %v307
    %309 = vst.msk [vmem:[%s7] sm:$0xff] %vm305, %v211
    // Predicated region
    $region34: #{tpu_custom_call.1} parent=1 // pred_check
      _
    $region35: #{tpu_custom_call.1} parent=1 // pred_check_branch
      %311 = sbr.rel (0) target = $region37
    $region36: #{tpu_custom_call.1} parent=1 // pred_region
      _
    $region37: #{tpu_custom_call.1} parent=1 // pred_fallthru
      _
    // Predicated region
    $region38: #{tpu_custom_call.1} parent=1 // pred_check
      _
    $region39: #{tpu_custom_call.1} parent=1 // pred_check_branch
      %313 = sbr.rel (0) target = $region41
    $region40: #{tpu_custom_call.1} parent=1 // pred_region
      %s315 = ssub.s32 128, 128
      %316 = vsyncadd [#allocation4], %s315
      %s318 = sshll.u32 [#allocation8], 4
      %s319 = int_to_ptr.vmem [resolvable:$true] %s318
      %321 = dma.vmem_to_hbm [thread:$0]  %s319, 128, %s6, [#allocation4]
    $region41: #{tpu_custom_call.1} parent=1 // pred_fallthru
      _
    // Predicated region
    $region42: #{tpu_custom_call.1} parent=1 // pred_check
      _
    $region43: #{tpu_custom_call.1} parent=1 // pred_check_branch
      %323 = sbr.rel (0) target = $region45
    $region44: #{tpu_custom_call.1} parent=1 // pred_region
      _
    $region45: #{tpu_custom_call.1} parent=1 // pred_fallthru
      _
    // Predicated region
    $region46: #{tpu_custom_call.1} parent=1 // pred_check
      _
    $region47: #{tpu_custom_call.1} parent=1 // pred_check_branch
      %325 = sbr.rel (0) target = $region49
    $region48: #{tpu_custom_call.1} parent=1 // pred_region
      _
    $region49: #{tpu_custom_call.1} parent=1 // pred_fallthru
      _
    // Predicated region
    $region50: #{tpu_custom_call.1} parent=1 // pred_check
      _
    $region51: #{tpu_custom_call.1} parent=1 // pred_check_branch
      %327 = sbr.rel (0) target = $region53
    $region52: #{tpu_custom_call.1} parent=1 // pred_region
      %328 = dma.done [#allocation4], 128
    $region53: #{tpu_custom_call.1} parent=1 // pred_fallthru
      _
    // Predicated region
    $region54: #{tpu_custom_call.1} parent=1 // pred_check
      _
    $region55: #{tpu_custom_call.1} parent=1 // pred_check_branch
      %330 = sbr.rel (0) target = $region57
    $region56: #{tpu_custom_call.1} parent=1 // pred_region
      _
    $region57: #{tpu_custom_call.1} parent=1 // pred_fallthru
      _
    %331 = vsyncpa [#allocation3], 1
    %332 = vsyncpa [#allocation6], 1
    %333 = vsyncpa [#allocation4], 1

</llo_original>
